<compile_context>
chip_gen: v6e
topology: v6e:2x2x1
jax: 0.10.0
libtpu: 0.0.40
codegen_flags: <defaults>
</compile_context>

<pallas_src>
import math
from functools import partial

import jax
import jax.numpy as jnp
from jax.experimental import pallas as pl
from jax.experimental.pallas import tpu as pltpu


# --------------------------- tile-size helper ------------------------------

def _pick_tile(dim, target, align):
    """Largest tile <= target that divides `dim` and is a multiple of `align`;
    falls back to the full dim (full-extent blocks are always legal)."""
    if dim <= target:
        return dim
    t = (target // align) * align
    while t >= align:
        if dim % t == 0:
            return t
        t -= align
    return dim


# --------------------------- tiled matmul kernel ----------------------------

def _matmul_kernel(a_ref, b_ref, o_ref, acc_ref):
    @pl.when(pl.program_id(2) == 0)
    def _():
        acc_ref[...] = jnp.zeros_like(acc_ref)

    acc_ref[...] += jnp.dot(a_ref[...], b_ref[...],
                            preferred_element_type=jnp.float32)

    @pl.when(pl.program_id(2) == pl.num_programs(2) - 1)
    def _():
        o_ref[...] = acc_ref[...].astype(o_ref.dtype)


def pallas_matmul(a, b, out_dtype=jnp.float32, *,
                  tm_target=256, tn_target=256, tk_target=512):
    """(M, K) @ (K, N) -> (M, N) tiled/pipelined MXU matmul.

    Tile targets are sized against v7x's 64 MiB VMEM (also fine on v5e/v6e).
    """
    M, K = a.shape
    K2, N = b.shape
    assert K == K2
    tm = _pick_tile(M, tm_target, 8)      # sublane dim: x8 or full
    tn = _pick_tile(N, tn_target, 128)    # lane dim:    x128 or full
    tk = _pick_tile(K, tk_target, 128)    # lane (A) / sublane (B): x128 or full
    grid = (M // tm, N // tn, K // tk)
    return pl.pallas_call(
        _matmul_kernel,
        out_shape=jax.ShapeDtypeStruct((M, N), out_dtype),
        grid=grid,
        in_specs=[pl.BlockSpec((tm, tk), lambda i, j, k: (i, k)),
                  pl.BlockSpec((tk, tn), lambda i, j, k: (k, j))],
        out_specs=pl.BlockSpec((tm, tn), lambda i, j, k: (i, j)),
        scratch_shapes=[pltpu.VMEM((tm, tn), jnp.float32)],
        compiler_params=pltpu.CompilerParams(
            dimension_semantics=("parallel", "parallel", "arbitrary")),
    )(a, b)


# ---------------------- flash-style causal attention ------------------------

_NEG_BIG = -1e30  # large-but-finite; avoids inf-inf NaNs in online softmax


def _flash_attn_kernel(q_ref, k_ref, v_ref, o_ref, m_sc, l_sc, acc_sc,
                       *, tq, tkv):
    qi = pl.program_id(1)
    ki = pl.program_id(2)

    @pl.when(ki == 0)
    def _():
        m_sc[...] = jnp.full_like(m_sc, _NEG_BIG)
        l_sc[...] = jnp.zeros_like(l_sc)
        acc_sc[...] = jnp.zeros_like(acc_sc)

    q_start = qi * tq
    kv_start = ki * tkv
    # Tile has at least one visible (col <= row) entry:
    not_skipped = kv_start < q_start + tq
    # Tile crosses the diagonal -> needs the per-element causal mask:
    needs_mask = kv_start + tkv - 1 > q_start

    def scores():
        # q @ k^T without an explicit transpose (contract last dims).
        return jax.lax.dot_general(
            q_ref[...], k_ref[...], (((1,), (1,)), ((), ())),
            preferred_element_type=jnp.float32)

    def update(s):
        m_prev = m_sc[...]
        m_new = jnp.maximum(m_prev, jnp.max(s, axis=-1, keepdims=True))
        alpha = jnp.exp(m_prev - m_new)
        p = jnp.exp(s - m_new)                       # f32 softmax math
        l_sc[...] = alpha * l_sc[...] + jnp.sum(p, axis=-1, keepdims=True)
        acc_sc[...] = alpha * acc_sc[...] + jnp.dot(
            p.astype(v_ref.dtype), v_ref[...],
            preferred_element_type=jnp.float32)
        m_sc[...] = m_new

    @pl.when(not_skipped & jnp.logical_not(needs_mask))
    def _():
        update(scores())                             # no mask off-diagonal

    @pl.when(not_skipped & needs_mask)
    def _():
        s = scores()
        row = q_start + jax.lax.broadcasted_iota(jnp.int32, (tq, tkv), 0)
        col = kv_start + jax.lax.broadcasted_iota(jnp.int32, (tq, tkv), 1)
        update(jnp.where(row >= col, s, _NEG_BIG))

    @pl.when(ki == pl.num_programs(2) - 1)
    def _():
        inv_l = pl.reciprocal(l_sc[...], approx=True)   # EUP slot
        o_ref[...] = (acc_sc[...] * inv_l).astype(o_ref.dtype)


def flash_causal_attention(q, k, v, *, tq_target=256, tkv_target=512):
    """q, k, v: (B, H, T, D) float32 -> (B, H, T, D) bfloat16 causal SDPA."""
    B, H, T, D = q.shape
    scale = 1.0 / math.sqrt(D)
    # Fold the softmax scale into q once (T*D mults instead of T*T).
    q = (q * scale).astype(jnp.bfloat16).reshape(B * H, T, D)
    k = k.astype(jnp.bfloat16).reshape(B * H, T, D)
    v = v.astype(jnp.bfloat16).reshape(B * H, T, D)

    tq = _pick_tile(T, tq_target, 8)
    tkv = _pick_tile(T, tkv_target, 8)
    grid = (B * H, T // tq, T // tkv)

    q_spec = pl.BlockSpec((None, tq, D), lambda bh, qi, ki: (bh, qi, 0))
    kv_spec = pl.BlockSpec((None, tkv, D), lambda bh, qi, ki: (bh, ki, 0))

    out = pl.pallas_call(
        partial(_flash_attn_kernel, tq=tq, tkv=tkv),
        out_shape=jax.ShapeDtypeStruct((B * H, T, D), jnp.bfloat16),
        grid=grid,
        in_specs=[q_spec, kv_spec, kv_spec],
        out_specs=q_spec,
        scratch_shapes=[pltpu.VMEM((tq, 1), jnp.float32),   # m
                        pltpu.VMEM((tq, 1), jnp.float32),   # l
                        pltpu.VMEM((tq, D), jnp.float32)],  # acc
        compiler_params=pltpu.CompilerParams(
            dimension_semantics=("parallel", "parallel", "arbitrary")),
    )(q, k, v)
    return out.reshape(B, H, T, D)


# ------------------------------ JAX glue ops ------------------------------

def rotary_cos_sin(T, dim, base=10000.0):
    inv_freq = 1.0 / (base ** (jnp.arange(0, dim, 2, dtype=jnp.float32) / dim))
    t = jnp.arange(T, dtype=jnp.float32)
    freqs = jnp.outer(t, inv_freq)                      # (T, dim//2)
    cos = jnp.cos(freqs).astype(jnp.bfloat16)
    sin = jnp.sin(freqs).astype(jnp.bfloat16)
    return cos[None, :, None, :], sin[None, :, None, :]


def apply_rotary_emb(x, cos, sin):
    assert x.ndim == 4
    d = x.shape[3] // 2
    x1, x2 = x[..., :d], x[..., d:]
    y1 = x1 * cos + x2 * sin
    y2 = x1 * (-sin) + x2 * cos
    return jnp.concatenate([y1, y2], axis=3).astype(x.dtype)


# ---------------------------- parameter setup -----------------------------

def _xavier_uniform(key, shape, fan_in, fan_out):
    a = math.sqrt(6.0 / (fan_in + fan_out))
    return jax.random.uniform(key, shape, jnp.float32, -a, a)


def init_params(key, n_embd, n_head, head_dim, rank):
    ks = jax.random.split(key, 6)
    p = {}
    # Weights stored as (in_features, out_features) so forward is x @ W.
    p["W_q"] = _xavier_uniform(ks[0], (n_embd, n_head * head_dim),
                               n_embd, n_head * head_dim)
    # Fans follow PyTorch's xavier on the (in, n_head, rank)/(in, rank, hd) views.
    p["W_A_k"] = _xavier_uniform(ks[1], (n_embd, n_head * rank),
                                 n_head * rank, n_embd * rank)
    p["W_A_v"] = _xavier_uniform(ks[2], (n_embd, n_head * rank),
                                 n_head * rank, n_embd * rank)
    p["W_B_k"] = _xavier_uniform(ks[3], (n_embd, rank * head_dim),
                                 rank * head_dim, n_embd * head_dim)
    p["W_B_v"] = _xavier_uniform(ks[4], (n_embd, rank * head_dim),
                                 rank * head_dim, n_embd * head_dim)
    # xATGLU output projection: Linear(n_head*head_dim -> 2*n_embd, bias=False).
    p["W_proj"] = _xavier_uniform(ks[5], (n_head * head_dim, 2 * n_embd),
                                  n_head * head_dim, 2 * n_embd)
    p["alpha"] = jnp.zeros((1,), jnp.float32)   # xATGLU learnable alpha, init 0
    return p


# ------------------------------ forward pass ------------------------------

def causal_self_attention_pallas(params, x, *, n_head, head_dim, rank):
    B, T, C = x.shape
    HD = n_head * head_dim
    Hr = n_head * rank
    rD = rank * head_dim

    x2d = x.reshape(B * T, C).astype(jnp.bfloat16)

    # --- fused CPLinear projections: one MXU pass over x ---
    W_fused = jnp.concatenate(
        [params["W_q"], params["W_A_k"], params["W_A_v"],
         params["W_B_k"], params["W_B_v"]], axis=1).astype(jnp.bfloat16)
    fused = pallas_matmul(x2d, W_fused, out_dtype=jnp.float32)

    off = 0
    q = fused[:, off:off + HD].reshape(B, T, n_head, head_dim); off += HD
    A_k = fused[:, off:off + Hr].reshape(B * T, n_head, rank);  off += Hr
    A_v = fused[:, off:off + Hr].reshape(B * T, n_head, rank);  off += Hr
    B_k = fused[:, off:off + rD].reshape(B * T, rank, head_dim); off += rD
    B_v = fused[:, off:off + rD].reshape(B * T, rank, head_dim)

    # tiny rank-2 CP contraction (XLA glue, not the hot path)
    k = (jnp.einsum("nhr,nrd->nhd", A_k, B_k) / rank).reshape(
        B, T, n_head, head_dim)
    v = (jnp.einsum("nhr,nrd->nhd", A_v, B_v) / rank).reshape(
        B, T, n_head, head_dim)

    # --- rotary embedding ---
    # TODO(synk): fuse RoPE into the attention kernel via pltpu.roll to drop
    # one q/k HBM round-trip; kept as JAX glue for guaranteed lowering here.
    cos, sin = rotary_cos_sin(T, head_dim)
    q = apply_rotary_emb(q, cos, sin)
    k = apply_rotary_emb(k, cos, sin)

    # --- flash causal attention (Pallas), bf16 MXU / f32 softmax ---
    qt = jnp.transpose(q, (0, 2, 1, 3))
    kt = jnp.transpose(k, (0, 2, 1, 3))
    vt = jnp.transpose(v, (0, 2, 1, 3))
    attn = flash_causal_attention(qt, kt, vt)             # (B, H, T, D) bf16
    attn = jnp.transpose(attn, (0, 2, 1, 3)).reshape(B * T, HD)

    # --- c_proj = xATGLU(HD -> n_embd, bias=False) ---
    proj = pallas_matmul(attn, params["W_proj"].astype(jnp.bfloat16),
                         out_dtype=jnp.float32)           # (B*T, 2*n_embd)
    n_embd = params["W_proj"].shape[1] // 2
    gate_path = proj[:, :n_embd]
    value_path = proj[:, n_embd:]
    # TODO(synk): xATGLU class body is not in the provided source; standard
    # arctan-gated GLU kept in plain JAX (tiny elementwise epilogue).
    gate = (jnp.arctan(gate_path) + math.pi / 2) * (1.0 / math.pi)
    alpha = params["alpha"][0]
    y = (gate * (1.0 + 2.0 * alpha) - alpha) * value_path
    return y.reshape(B, T, n_embd)


# --------------------------- pure-JAX reference ----------------------------

def causal_self_attention_ref(params, x, *, n_head, head_dim, rank):
    B, T, C = x.shape
    x2d = x.reshape(B * T, C)
    q = (x2d @ params["W_q"]).reshape(B, T, n_head, head_dim)
    A_k = (x2d @ params["W_A_k"]).reshape(B * T, n_head, rank)
    A_v = (x2d @ params["W_A_v"]).reshape(B * T, n_head, rank)
    B_k = (x2d @ params["W_B_k"]).reshape(B * T, rank, head_dim)
    B_v = (x2d @ params["W_B_v"]).reshape(B * T, rank, head_dim)
    k = (jnp.einsum("nhr,nrd->nhd", A_k, B_k) / rank).reshape(
        B, T, n_head, head_dim)
    v = (jnp.einsum("nhr,nrd->nhd", A_v, B_v) / rank).reshape(
        B, T, n_head, head_dim)
    cos, sin = rotary_cos_sin(T, head_dim)
    q = apply_rotary_emb(q, cos, sin)
    k = apply_rotary_emb(k, cos, sin)
    qt = jnp.transpose(q, (0, 2, 1, 3))
    kt = jnp.transpose(k, (0, 2, 1, 3))
    vt = jnp.transpose(v, (0, 2, 1, 3))
    s = jnp.einsum("bhtd,bhsd->bhts", qt, kt) / math.sqrt(head_dim)
    mask = jnp.tril(jnp.ones((T, T), dtype=bool))
    s = jnp.where(mask, s, -1e30)
    p = jax.nn.softmax(s, axis=-1)
    attn = jnp.einsum("bhts,bhsd->bhtd", p, vt)
    attn = jnp.transpose(attn, (0, 2, 1, 3)).reshape(B * T, n_head * head_dim)
    proj = attn @ params["W_proj"]
    n_embd = params["W_proj"].shape[1] // 2
    gate = (jnp.arctan(proj[:, :n_embd]) + math.pi / 2) / math.pi
    alpha = params["alpha"][0]
    y = (gate * (1.0 + 2.0 * alpha) - alpha) * proj[:, n_embd:]
    return y.reshape(B, T, n_embd)


# --------------------------------- main ------------------------------------

if __name__ == "__main__":
    B, T = 2, 8
    n_embd, n_head, head_dim, rank = 32, 4, 16, 2   # q_rank unused in forward

    key = jax.random.PRNGKey(0)
    kx, kp = jax.random.split(key)
    x = jax.random.normal(kx, (B, T, n_embd), dtype=jnp.float32)
    params = init_params(kp, n_embd, n_head, head_dim, rank)

    y = causal_self_attention_pallas(params, x, n_head=n_head,
                                     head_dim=head_dim, rank=rank)
    y = jax.block_until_ready(y)
    assert y.shape == (B, T, n_embd) and y.dtype == jnp.float32

    y_ref = causal_self_attention_ref(params, x, n_head=n_head,
                                      head_dim=head_dim, rank=rank)
    y_ref = jax.block_until_ready(y_ref)
    assert jnp.allclose(y, y_ref, rtol=5e-2, atol=5e-2), "Pallas/JAX mismatch"

    print("KERNEL_OK")
</pallas_src>

<mosaic_0001>
module attributes {stable_mosaic.version = 11 : i64} {
  func.func @_matmul_kernel(%arg0: i32, %arg1: i32, %arg2: i32, %arg3: memref<16x32xbf16, #tpu.memory_space<vmem>>, %arg4: memref<32x144xbf16, #tpu.memory_space<vmem>>, %arg5: memref<16x144xf32, #tpu.memory_space<vmem>>, %arg6: memref<16x144xf32, #tpu.memory_space<vmem>>) attributes {dimension_semantics = [#tpu.dimension_semantics<parallel>, #tpu.dimension_semantics<parallel>, #tpu.dimension_semantics<arbitrary>], iteration_bounds = array<i64: 1, 1, 1>, scalar_prefetch = 0 : i64, scratch_operands = 1 : i64, tpu.core_type = #tpu.core_type<tc>, window_params = [{transform_indices = @transform_0, window_bounds = array<i64: 16, 32>}, {transform_indices = @transform_1, window_bounds = array<i64: 32, 144>}, {transform_indices = @transform_2, window_bounds = array<i64: 16, 144>}]} {
    %c0_i32 = arith.constant 0 : i32
    %0 = arith.cmpi eq, %arg2, %c0_i32 : i32
    %1 = arith.extui %0 : i1 to i32
    %c0_i32_0 = arith.constant 0 : i32
    %2 = arith.cmpi ne, %1, %c0_i32_0 : i32
    scf.if %2 {
      %cst_10 = arith.constant 0.000000e+00 : f32
      %12 = vector.broadcast %cst_10 : f32 to vector<16x144xf32>
      %c0_11 = arith.constant 0 : index
      %c0_12 = arith.constant 0 : index
      %13 = vector.load %arg6[%c0_11, %c0_12] : memref<16x144xf32, #tpu.memory_space<vmem>>, vector<16x144xf32>
      tpu.vector_store %arg6[%c0_11, %c0_12], %12 {strides = array<i32>} : memref<16x144xf32, #tpu.memory_space<vmem>>, vector<16x144xf32>,
    } else {
    }
    %c0 = arith.constant 0 : index
    %c0_1 = arith.constant 0 : index
    %3 = vector.load %arg6[%c0, %c0_1] : memref<16x144xf32, #tpu.memory_space<vmem>>, vector<16x144xf32>
    %c0_2 = arith.constant 0 : index
    %c0_3 = arith.constant 0 : index
    %4 = vector.load %arg3[%c0_2, %c0_3] : memref<16x32xbf16, #tpu.memory_space<vmem>>, vector<16x32xbf16>
    %c0_4 = arith.constant 0 : index
    %c0_5 = arith.constant 0 : index
    %5 = vector.load %arg4[%c0_4, %c0_5] : memref<32x144xbf16, #tpu.memory_space<vmem>>, vector<32x144xbf16>
    %cst = arith.constant dense<0.000000e+00> : vector<16x144xf32>
    %6 = tpu.matmul %4, %5, %cst {dimension_numbers = #tpu.dot_dimension_numbers<[1], [0], [0], [1], [0, 0, 1, 1], [], []>} : vector<16x32xbf16>, vector<32x144xbf16>, vector<16x144xf32> -> vector<16x144xf32>
    %7 = arith.addf %3, %6 : vector<16x144xf32>
    %c0_6 = arith.constant 0 : index
    %c0_7 = arith.constant 0 : index
    %8 = vector.load %arg6[%c0_6, %c0_7] : memref<16x144xf32, #tpu.memory_space<vmem>>, vector<16x144xf32>
    tpu.vector_store %arg6[%c0_6, %c0_7], %7 {strides = array<i32>} : memref<16x144xf32, #tpu.memory_space<vmem>>, vector<16x144xf32>,
    %c0_i32_8 = arith.constant 0 : i32
    %9 = arith.cmpi eq, %arg2, %c0_i32_8 : i32
    %10 = arith.extui %9 : i1 to i32
    %c0_i32_9 = arith.constant 0 : i32
    %11 = arith.cmpi ne, %10, %c0_i32_9 : i32
    scf.if %11 {
      %c0_10 = arith.constant 0 : index
      %c0_11 = arith.constant 0 : index
      %12 = vector.load %arg6[%c0_10, %c0_11] : memref<16x144xf32, #tpu.memory_space<vmem>>, vector<16x144xf32>
      %c0_12 = arith.constant 0 : index
      %c0_13 = arith.constant 0 : index
      %13 = vector.load %arg5[%c0_12, %c0_13] : memref<16x144xf32, #tpu.memory_space<vmem>>, vector<16x144xf32>
      tpu.vector_store %arg5[%c0_12, %c0_13], %12 {strides = array<i32>} : memref<16x144xf32, #tpu.memory_space<vmem>>, vector<16x144xf32>,
    } else {
    }
    return
  }
  func.func @transform_0(%arg0: i32, %arg1: i32, %arg2: i32) -> (i32, i32) {
    %c0_i32 = arith.constant 0 : i32
    return %arg0, %arg2 : i32, i32
  }
  func.func @transform_1(%arg0: i32, %arg1: i32, %arg2: i32) -> (i32, i32) {
    %c0_i32 = arith.constant 0 : i32
    return %arg2, %arg1 : i32, i32
  }
  func.func @transform_2(%arg0: i32, %arg1: i32, %arg2: i32) -> (i32, i32) {
    %c0_i32 = arith.constant 0 : i32
    return %arg0, %arg1 : i32, i32
  }
}

</mosaic_0001>

<llo_original>
// kernel: tpu_custom_call.1
$region0: #{tpu_custom_call.1}
  #allocation0 [shape = 'u32[]', space=smem, size = 0x4, offset = 0x4, fixed_abs, tag = 'smem constant byte address 0x4 - core index']
  #allocation1 [shape = 'u32[144,128]{1,0:T(1,128)}', space=vmem, size = 0x12000, scoped, tag = 'internal scratch']
  #allocation2 [shape = 'f32[16,144]{1,0:T(8,128)}', space=vmem, size = 0x4000, scoped, tag = 'scratch operand']
  %s0 = inlined_call_operand.hbm [shape: bf16[16,32], index: 0, kind: input, shape index: {}]
  %s1 = inlined_call_operand.hbm [shape: bf16[32,144], index: 1, kind: input, shape index: {}]
  %s2 = inlined_call_operand.hbm [shape: f32[16,144], index: 2, kind: output, shape index: {}]
  %s3 = sld [smem:[#allocation0]]
  $region34: #{tpu_custom_call.1} parent=0
    _
  %s5 = ssub.s32 1, %s3
  %s6 = scalar_select 0, %s5, %s3
  $region1: #{tpu_custom_call.1} parent=0
    #allocation3 [shape = 'u8[4096]{0}', space=vmem, size = 0x1000, scoped, tag = 'input window, operand 0, single buffered']
    #allocation4 [shape = 's32[1]{0}', space=sflag, size = 0x4, scoped, tag = 'scoped memory for tpu_custom_call.1']
    #allocation5 [shape = 's32[1]{0}', space=sflag, size = 0x4, scoped, tag = 'scoped memory for tpu_custom_call.1']
    #allocation6 [shape = 'u8[16384]{0}', space=vmem, size = 0x4000, scoped, tag = 'input window, operand 1, single buffered']
    #allocation7 [shape = 's32[1]{0}', space=sflag, size = 0x4, scoped, tag = 'scoped memory for tpu_custom_call.1']
    #allocation8 [shape = 'u8[16384]{0}', space=vmem, size = 0x4000, scoped, tag = 'output window, operand 0, single buffered']
    %7 = vsyncpa [#allocation4], 0
    %8 = vsyncpa [#allocation7], 0
    %9 = vsyncpa [#allocation5], 0
    // Predicated region
    $region2: #{tpu_custom_call.1} parent=1 // pred_check
      _
    $region3: #{tpu_custom_call.1} parent=1 // pred_check_branch
      %11 = sbr.rel (0) target = $region5
    $region4: #{tpu_custom_call.1} parent=1 // pred_region
      %s13 = ssub.s32 128, 128
      %14 = vsyncadd [#allocation4], %s13
      %s15 = sshll.u32 [#allocation3], 4
      %s16 = int_to_ptr.vmem [resolvable:$true] %s15
      %21 = dma.hbm_to_vmem [thread:$0]  %s0, 128, %s16, [#allocation4], 64, 64, 4
    $region5: #{tpu_custom_call.1} parent=1 // pred_fallthru
      _
    // Predicated region
    $region6: #{tpu_custom_call.1} parent=1 // pred_check
      _
    $region7: #{tpu_custom_call.1} parent=1 // pred_check_branch
      %23 = sbr.rel (0) target = $region9
    $region8: #{tpu_custom_call.1} parent=1 // pred_region
      %s25 = ssub.s32 512, 512
      %26 = vsyncadd [#allocation7], %s25
      %s27 = sshll.u32 [#allocation6], 4
      %s28 = int_to_ptr.vmem [resolvable:$true] %s27
      %33 = dma.hbm_to_vmem [thread:$0]  %s1, 512, %s28, [#allocation7], 128, 128, 8
    $region9: #{tpu_custom_call.1} parent=1 // pred_fallthru
      _
    // Predicated region
    $region10: #{tpu_custom_call.1} parent=1 // pred_check
      _
    $region11: #{tpu_custom_call.1} parent=1 // pred_check_branch
      %35 = sbr.rel (0) target = $region13
    $region12: #{tpu_custom_call.1} parent=1 // pred_region
      %36 = dma.done [#allocation4], 128
    $region13: #{tpu_custom_call.1} parent=1 // pred_fallthru
      _
    // Predicated region
    $region14: #{tpu_custom_call.1} parent=1 // pred_check
      _
    $region15: #{tpu_custom_call.1} parent=1 // pred_check_branch
      %38 = sbr.rel (0) target = $region17
    $region16: #{tpu_custom_call.1} parent=1 // pred_region
      %39 = dma.done [#allocation7], 512
    $region17: #{tpu_custom_call.1} parent=1 // pred_fallthru
      _
    %p41 = scmp.eq.s32.totalorder 0, 0
    // Predicated region
    $region18: #{tpu_custom_call.1} parent=1 // pred_check
      %p42 = pneg %p41
    $region19: #{tpu_custom_call.1} parent=1 // pred_check_branch
      %44 = sbr.rel (%p42) target = $region21
    $region20: #{tpu_custom_call.1} parent=1 // pred_region
      %45 = vst [vmem:[#allocation2] sm:$0xff] 0.0
      %vm46 = vcmask 130048
      %47 = vst.msk [vmem:[#allocation2 + $0x8] sm:$0xff] %vm46, 0.0
      %48 = vst [vmem:[#allocation2 + $0x10] sm:$0xff] 0.0
      %49 = vst.msk [vmem:[#allocation2 + $0x18] sm:$0xff] %vm46, 0.0
    $region21: #{tpu_custom_call.1} parent=1 // pred_fallthru
      _
    %v50 = vld [vmem:[#allocation2] sm:$0xff]
    %v51 = vld [vmem:[#allocation2 + $0x8] sm:$0xff]
    %v52 = vld [vmem:[#allocation2 + $0x10] sm:$0xff]
    %v53 = vld [vmem:[#allocation2 + $0x18] sm:$0xff]
    %v54 = vld [vmem:[#allocation3] sm:$0xf]
    %v55 = vld [vmem:[#allocation3 + $0x4] sm:$0xf]
    %v56 = vld [vmem:[#allocation6] sm:$0xff]
    %v57 = vld [vmem:[#allocation6 + $0x8] sm:$0xff]
    %v58 = vld [vmem:[#allocation6 + $0x10] sm:$0xff]
    %v59 = vld [vmem:[#allocation6 + $0x18] sm:$0xff]
    %v62 = vunpack.c.l.b16 %v54
    %v63 = vunpack.c.l.b16 %v55
    %v64 = vpack.c.b16 %v63, %v62
    %v69 = vunpack.c.l.b16 %v56
    %v70 = vunpack.c.h.b16 %v56
    %v71 = vunpack.c.l.b16 %v57
    %v72 = vunpack.c.h.b16 %v57
    %v73 = vunpack.c.l.b16 %v58
    %v74 = vunpack.c.h.b16 %v58
    %v75 = vunpack.c.l.b16 %v59
    %v76 = vunpack.c.h.b16 %v59
    %v77 = vpack.c.b16 %v71, %v69
    %v78 = vpack.c.b16 %v72, %v70
    %v79 = vpack.c.b16 %v75, %v73
    %v80 = vpack.c.b16 %v76, %v74
    %vm85 = vcmask 261120
    %v87 = vsel %vm85, %v64, 0
    %89 = vmatprep.subr.bf16.mxu0 0
    %90 = vmatpush1.bf16.msra.mxu0 0
    %91 = vmatprep.subr.bf16.mxu0 0
    %92 = vmatpush1.bf16.msra.mxu0 0
    %93 = vmatprep.subr.bf16.mxu0 0
    %94 = vmatpush1.bf16.msra.mxu0 0
    %95 = vmatprep.subr.bf16.mxu0 0
    %96 = vmatpush1.bf16.msra.mxu0 0
    %97 = vmatprep.subr.bf16.mxu0 0
    %98 = vmatpush1.bf16.msra.mxu0 0
    %99 = vmatprep.subr.bf16.mxu0 0
    %100 = vmatpush1.bf16.msra.mxu0 0
    %101 = vmatprep.subr.bf16.mxu0 %v80
    %102 = vmatpush1.bf16.msra.mxu0 %v79
    %103 = vmatprep.subr.bf16.mxu0 %v78
    %104 = vmatpush1.bf16.msra.mxu0 %v77
    %105 = vmatprep.subr.bf16.mxu0 0
    %106 = vmatpush2.bf16.msra.mxu0 0
    %107 = vmatprep.subr.bf16.mxu0 0
    %108 = vmatpush2.bf16.msra.mxu0 0
    %109 = vmatprep.subr.bf16.mxu0 0
    %110 = vmatpush2.bf16.msra.mxu0 0
    %111 = vmatprep.subr.bf16.mxu0 0
    %112 = vmatpush2.bf16.msra.mxu0 0
    %113 = vmatprep.subr.bf16.mxu0 0
    %114 = vmatpush2.bf16.msra.mxu0 0
    %115 = vmatprep.subr.bf16.mxu0 0
    %116 = vmatpush2.bf16.msra.mxu0 0
    %117 = vmatprep.subr.bf16.mxu0 0
    %118 = vmatpush2.bf16.msra.mxu0 0
    %119 = vmatprep.subr.bf16.mxu0 0
    %120 = vmatpush2.bf16.msra.mxu0 0
    %121 = vmatprep.mubr.bf16.mxu0 0
    %122 = vmatmul.mubr.bf16.gmra.mxu0 %v87
    %v123 = vpop.f32.mrf.mxu0
    %v124 = vadd.f32 0.0, %v123
    %v125 = vpop.f32.mrf.mxu0
    %v126 = vadd.f32 0.0, %v125
    %v127 = vpop.f32.mrf.mxu0
    %v128 = vadd.f32 0.0, %v127
    %v129 = vpop.f32.mrf.mxu0
    %v130 = vadd.f32 0.0, %v129
    %131 = vdwg.mxu0
    %v132 = vadd.f32 %v50, %v124
    %v133 = vadd.f32 %v51, %v126
    %v134 = vadd.f32 %v52, %v128
    %v135 = vadd.f32 %v53, %v130
    %136 = vst [vmem:[#allocation2] sm:$0xff] %v132
    %vm137 = vcmask 130048
    %138 = vst.msk [vmem:[#allocation2 + $0x8] sm:$0xff] %vm137, %v133
    %139 = vst [vmem:[#allocation2 + $0x10] sm:$0xff] %v134
    %140 = vst.msk [vmem:[#allocation2 + $0x18] sm:$0xff] %vm137, %v135
    // Predicated region
    $region22: #{tpu_custom_call.1} parent=1 // pred_check
      %p141 = pneg %p41
    $region23: #{tpu_custom_call.1} parent=1 // pred_check_branch
      %143 = sbr.rel (%p141) target = $region25
    $region24: #{tpu_custom_call.1} parent=1 // pred_region
      %v144 = vld [vmem:[#allocation2] sm:$0xff]
      %v145 = vld [vmem:[#allocation2 + $0x8] sm:$0xff]
      %v146 = vld [vmem:[#allocation2 + $0x10] sm:$0xff]
      %v147 = vld [vmem:[#allocation2 + $0x18] sm:$0xff]
      %148 = vst [vmem:[#allocation8] sm:$0xff] %v144
      %149 = vst.msk [vmem:[#allocation8 + $0x8] sm:$0xff] %vm137, %v145
      %150 = vst [vmem:[#allocation8 + $0x10] sm:$0xff] %v146
      %151 = vst.msk [vmem:[#allocation8 + $0x18] sm:$0xff] %vm137, %v147
    $region25: #{tpu_custom_call.1} parent=1 // pred_fallthru
      _
    // Predicated region
    $region26: #{tpu_custom_call.1} parent=1 // pred_check
      _
    $region27: #{tpu_custom_call.1} parent=1 // pred_check_branch
      %153 = sbr.rel (0) target = $region29
    $region28: #{tpu_custom_call.1} parent=1 // pred_region
      %s155 = ssub.s32 512, 512
      %156 = vsyncadd [#allocation5], %s155
      %s157 = sshll.u32 [#allocation8], 4
      %s158 = int_to_ptr.vmem [resolvable:$true] %s157
      %163 = dma.vmem_to_hbm [thread:$0]  %s158, 512, %s2, [#allocation5], 256, 256, 16
    $region29: #{tpu_custom_call.1} parent=1 // pred_fallthru
      _
    // Predicated region
    $region30: #{tpu_custom_call.1} parent=1 // pred_check
      _
    $region31: #{tpu_custom_call.1} parent=1 // pred_check_branch
      %165 = sbr.rel (0) target = $region33
    $region32: #{tpu_custom_call.1} parent=1 // pred_region
      %166 = dma.done [#allocation5], 512
    $region33: #{tpu_custom_call.1} parent=1 // pred_fallthru
      _
    %167 = vsyncpa [#allocation4], 1
    %168 = vsyncpa [#allocation7], 1
    %169 = vsyncpa [#allocation5], 1

</llo_original>
